<compile_context>
chip_gen: v5e
topology: v5e:2x2
jax: 0.10.0
libtpu: 0.0.40
codegen_flags: <defaults>
</compile_context>

<pallas_src>
import jax
import jax.numpy as jnp
from jax.experimental import pallas as pl
from jax.experimental.pallas import tpu as pltpu


def _round_up(n, m):
    return ((n + m - 1) // m) * m


def _leaky_relu(x, slope=0.2):
    # max(x, slope*x) == LeakyReLU(slope) for 0 < slope < 1; 2 VALU ops/elem.
    return jnp.maximum(x, slope * x)


def discriminator_kernel(x_ref, w1_ref, b1_ref, w2_ref, b2_ref, w3_ref, b3_ref,
                         out_ref):
    # Layer 1: [TB, D] @ [D, 256]  (MXU, bf16 operands, f32 accumulate).
    x = x_ref[...].astype(jnp.bfloat16)
    h1 = jnp.dot(x, w1_ref[...], preferred_element_type=jnp.float32)
    h1 = _leaky_relu(h1 + b1_ref[...])

    # Layer 2: [TB, 256] @ [256, 128]  (MXU, bf16 operands, f32 accumulate).
    h2 = jnp.dot(h1.astype(jnp.bfloat16), w2_ref[...],
                 preferred_element_type=jnp.float32)
    h2 = _leaky_relu(h2 + b2_ref[...])

    # Layer 3: output width 1 -> VPU multiply + XLU lane reduction instead of
    # a wasteful N=1 MXU matmul.  w3_ref holds the weight column as (1, 128).
    h3 = jnp.sum(h2 * w3_ref[...], axis=-1, keepdims=True) + b3_ref[...]

    # Sigmoid: exp and the approximate reciprocal both run on the EUP.
    out_ref[...] = pl.reciprocal(1.0 + jnp.exp(-h3), approx=True).astype(
        out_ref.dtype)


def discriminator_forward(x, params, *, block_b=1024):
    """x: [B, input_dim] float32 -> [B, 1] float32 probabilities."""
    w1, b1, w2, b2, w3, b3 = params
    B, D = x.shape
    assert w1.shape[0] == D

    h1_dim = w1.shape[1]  # 256
    h2_dim = w2.shape[1]  # 128

    # Batch tile: sublane-aligned, <= block_b, and capped so there are at
    # least 2 grid tiles whenever B allows (both v7x TensorCores stay busy).
    tb = max(8, min(block_b, _round_up(pl.cdiv(B, 2), 8)))
    n_tiles = pl.cdiv(B, tb)

    # Weights resident in VMEM (constant index_maps); matmul operands in bf16.
    w1_b = w1.astype(jnp.bfloat16)
    w2_b = w2.astype(jnp.bfloat16)
    w3_row = w3.reshape(1, h2_dim).astype(jnp.float32)

    out = pl.pallas_call(
        discriminator_kernel,
        out_shape=jax.ShapeDtypeStruct((B, 1), jnp.float32),
        grid_spec=pltpu.PrefetchScalarGridSpec(
            num_scalar_prefetch=0,
            grid=(n_tiles,),
            in_specs=[
                pl.BlockSpec((tb, D), lambda i: (i, 0)),           # x tile
                pl.BlockSpec((D, h1_dim), lambda i: (0, 0)),       # w1 (resident)
                pl.BlockSpec((1, h1_dim), lambda i: (0, 0)),       # b1
                pl.BlockSpec((h1_dim, h2_dim), lambda i: (0, 0)),  # w2 (resident)
                pl.BlockSpec((1, h2_dim), lambda i: (0, 0)),       # b2
                pl.BlockSpec((1, h2_dim), lambda i: (0, 0)),       # w3 row
                pl.BlockSpec((1, 1), lambda i: (0, 0)),            # b3
            ],
            out_specs=pl.BlockSpec((tb, 1), lambda i: (i, 0)),
        ),
        compiler_params=pltpu.CompilerParams(
            dimension_semantics=("parallel",)),
    )(x, w1_b, b1, w2_b, b2, w3_row, b3)

    return out


def init_params(input_dim, key):
    """Deterministic init mimicking nn.Linear defaults: U(-1/sqrt(fan_in), +)."""
    def linear(key, fan_in, fan_out):
        kw, kb = jax.random.split(key)
        bound = 1.0 / (fan_in ** 0.5)
        w = jax.random.uniform(kw, (fan_in, fan_out), jnp.float32, -bound, bound)
        b = jax.random.uniform(kb, (1, fan_out), jnp.float32, -bound, bound)
        return w, b

    k1, k2, k3 = jax.random.split(key, 3)
    w1, b1 = linear(k1, input_dim, 256)
    w2, b2 = linear(k2, 256, 128)
    w3, b3 = linear(k3, 128, 1)
    return (w1, b1, w2, b2, w3, b3)


def reference_forward(x, params):
    """Plain f32 JAX reference for correctness check."""
    w1, b1, w2, b2, w3, b3 = params
    h = _leaky_relu(x @ w1 + b1)
    h = _leaky_relu(h @ w2 + b2)
    return jax.nn.sigmoid(h @ w3 + b3)


if __name__ == "__main__":
    key = jax.random.PRNGKey(0)
    k_x, k_p, k_x2 = jax.random.split(key, 3)

    input_dim = 64  # e.g. a flattened 8x8 "image"
    params = init_params(input_dim, k_p)

    # bf16 MXU operands + approx reciprocal sigmoid => compare against the
    # f32 reference with a relaxed tolerance.
    TOL = 2e-2

    # Small smoke test (single grid tile).
    x_small = jax.random.normal(k_x, (8, input_dim), dtype=jnp.float32)
    out_small = jax.block_until_ready(discriminator_forward(x_small, params))
    ref_small = reference_forward(x_small, params)
    assert out_small.shape == (8, 1)
    assert jnp.allclose(out_small, ref_small, atol=TOL, rtol=TOL), \
        "small-batch mismatch vs reference"

    # Multi-tile test: exercises batch tiling, resident weights, "parallel"
    # grid semantics, and the non-divisible partial last block
    # (B=1000 -> tb=504, 2 tiles, last tile partially out of range).
    x_big = jax.random.normal(k_x2, (1000, input_dim), dtype=jnp.float32)
    out_big = jax.block_until_ready(discriminator_forward(x_big, params))
    ref_big = reference_forward(x_big, params)
    assert out_big.shape == (1000, 1)
    assert jnp.allclose(out_big, ref_big, atol=TOL, rtol=TOL), \
        "tiled-batch mismatch vs reference"

    print("KERNEL_OK")
</pallas_src>

<mosaic_0001>
module attributes {stable_mosaic.version = 11 : i64} {
  func.func @discriminator_kernel(%arg0: i32, %arg1: memref<8x64xf32, #tpu.memory_space<vmem>>, %arg2: memref<64x256xbf16, #tpu.memory_space<vmem>>, %arg3: memref<1x256xf32, #tpu.memory_space<vmem>>, %arg4: memref<256x128xbf16, #tpu.memory_space<vmem>>, %arg5: memref<1x128xf32, #tpu.memory_space<vmem>>, %arg6: memref<1x128xf32, #tpu.memory_space<vmem>>, %arg7: memref<1x1xf32, #tpu.memory_space<vmem>>, %arg8: memref<8x1xf32, #tpu.memory_space<vmem>>) attributes {dimension_semantics = [#tpu.dimension_semantics<parallel>], iteration_bounds = array<i64: 1>, scalar_prefetch = 0 : i64, scratch_operands = 0 : i64, tpu.core_type = #tpu.core_type<tc>, window_params = [{transform_indices = @transform_0, window_bounds = array<i64: 8, 64>}, {pipeline_mode = #tpu.pipeline_mode<synchronous>, transform_indices = @transform_1, window_bounds = array<i64: 64, 256>}, {pipeline_mode = #tpu.pipeline_mode<synchronous>, transform_indices = @transform_2, window_bounds = array<i64: 1, 256>}, {pipeline_mode = #tpu.pipeline_mode<synchronous>, transform_indices = @transform_3, window_bounds = array<i64: 256, 128>}, {pipeline_mode = #tpu.pipeline_mode<synchronous>, transform_indices = @transform_4, window_bounds = array<i64: 1, 128>}, {pipeline_mode = #tpu.pipeline_mode<synchronous>, transform_indices = @transform_5, window_bounds = array<i64: 1, 128>}, {pipeline_mode = #tpu.pipeline_mode<synchronous>, transform_indices = @transform_6, window_bounds = array<i64: 1, 1>}, {transform_indices = @transform_7, window_bounds = array<i64: 8, 1>}]} {
    %c0 = arith.constant 0 : index
    %c0_0 = arith.constant 0 : index
    %0 = vector.load %arg1[%c0, %c0_0] : memref<8x64xf32, #tpu.memory_space<vmem>>, vector<8x64xf32>
    %1 = arith.truncf %0 : vector<8x64xf32> to vector<8x64xbf16>
    %c0_1 = arith.constant 0 : index
    %c0_2 = arith.constant 0 : index
    %2 = vector.load %arg2[%c0_1, %c0_2] : memref<64x256xbf16, #tpu.memory_space<vmem>>, vector<64x256xbf16>
    %cst = arith.constant dense<0.000000e+00> : vector<8x256xf32>
    %3 = tpu.matmul %1, %2, %cst {dimension_numbers = #tpu.dot_dimension_numbers<[1], [0], [0], [1], [0, 0, 1, 1], [], []>} : vector<8x64xbf16>, vector<64x256xbf16>, vector<8x256xf32> -> vector<8x256xf32>
    %c0_3 = arith.constant 0 : index
    %c0_4 = arith.constant 0 : index
    %4 = vector.load %arg3[%c0_3, %c0_4] : memref<1x256xf32, #tpu.memory_space<vmem>>, vector<1x256xf32>
    %5 = vector.broadcast %4 : vector<1x256xf32> to vector<8x256xf32>
    %6 = arith.addf %3, %5 : vector<8x256xf32>
    %cst_5 = arith.constant 2.000000e-01 : f32
    %7 = vector.broadcast %cst_5 : f32 to vector<8x256xf32>
    %8 = arith.mulf %7, %6 : vector<8x256xf32>
    %9 = arith.maximumf %6, %8 : vector<8x256xf32>
    %10 = arith.truncf %9 : vector<8x256xf32> to vector<8x256xbf16>
    %c0_6 = arith.constant 0 : index
    %c0_7 = arith.constant 0 : index
    %11 = vector.load %arg4[%c0_6, %c0_7] : memref<256x128xbf16, #tpu.memory_space<vmem>>, vector<256x128xbf16>
    %cst_8 = arith.constant dense<0.000000e+00> : vector<8x128xf32>
    %12 = tpu.matmul %10, %11, %cst_8 {dimension_numbers = #tpu.dot_dimension_numbers<[1], [0], [0], [1], [0, 0, 1, 1], [], []>} : vector<8x256xbf16>, vector<256x128xbf16>, vector<8x128xf32> -> vector<8x128xf32>
    %c0_9 = arith.constant 0 : index
    %c0_10 = arith.constant 0 : index
    %13 = vector.load %arg5[%c0_9, %c0_10] : memref<1x128xf32, #tpu.memory_space<vmem>>, vector<1x128xf32>
    %14 = vector.broadcast %13 : vector<1x128xf32> to vector<8x128xf32>
    %15 = arith.addf %12, %14 : vector<8x128xf32>
    %cst_11 = arith.constant 2.000000e-01 : f32
    %16 = vector.broadcast %cst_11 : f32 to vector<8x128xf32>
    %17 = arith.mulf %16, %15 : vector<8x128xf32>
    %18 = arith.maximumf %15, %17 : vector<8x128xf32>
    %c0_12 = arith.constant 0 : index
    %c0_13 = arith.constant 0 : index
    %19 = vector.load %arg6[%c0_12, %c0_13] : memref<1x128xf32, #tpu.memory_space<vmem>>, vector<1x128xf32>
    %20 = vector.broadcast %19 : vector<1x128xf32> to vector<8x128xf32>
    %21 = arith.mulf %18, %20 : vector<8x128xf32>
    %cst_14 = arith.constant dense<0.000000e+00> : vector<8xf32>
    %22 = vector.multi_reduction <add>, %21, %cst_14 [1] : vector<8x128xf32> to vector<8xf32>
    %23 = vector.shape_cast %22 : vector<8xf32> to vector<8x1xf32>
    %c0_15 = arith.constant 0 : index
    %c0_16 = arith.constant 0 : index
    %24 = vector.load %arg7[%c0_15, %c0_16] : memref<1x1xf32, #tpu.memory_space<vmem>>, vector<1x1xf32>
    %25 = vector.broadcast %24 : vector<1x1xf32> to vector<8x1xf32>
    %26 = arith.addf %23, %25 : vector<8x1xf32>
    %cst_17 = arith.constant 0.000000e+00 : f32
    %27 = vector.broadcast %cst_17 : f32 to vector<8x1xf32>
    %28 = arith.subf %27, %26 : vector<8x1xf32>
    %29 = math.exp %28 : vector<8x1xf32>
    %cst_18 = arith.constant 1.000000e+00 : f32
    %30 = vector.broadcast %cst_18 : f32 to vector<8x1xf32>
    %31 = arith.addf %30, %29 : vector<8x1xf32>
    %32 = tpu.reciprocal %31 {approx = true} : vector<8x1xf32> -> vector<8x1xf32>
    %c0_19 = arith.constant 0 : index
    %c0_20 = arith.constant 0 : index
    %33 = vector.load %arg8[%c0_19, %c0_20] : memref<8x1xf32, #tpu.memory_space<vmem>>, vector<8x1xf32>
    tpu.vector_store %arg8[%c0_19, %c0_20], %32 {strides = array<i32>} : memref<8x1xf32, #tpu.memory_space<vmem>>, vector<8x1xf32>,
    return
  }
  func.func @transform_0(%arg0: i32) -> (i32, i32) {
    %c0_i32 = arith.constant 0 : i32
    %c0_i32_0 = arith.constant 0 : i32
    return %arg0, %c0_i32 : i32, i32
  }
  func.func @transform_1(%arg0: i32) -> (i32, i32) {
    %c0_i32 = arith.constant 0 : i32
    %c0_i32_0 = arith.constant 0 : i32
    %c0_i32_1 = arith.constant 0 : i32
    return %c0_i32, %c0_i32_0 : i32, i32
  }
  func.func @transform_2(%arg0: i32) -> (i32, i32) {
    %c0_i32 = arith.constant 0 : i32
    %c0_i32_0 = arith.constant 0 : i32
    %c0_i32_1 = arith.constant 0 : i32
    return %c0_i32, %c0_i32_0 : i32, i32
  }
  func.func @transform_3(%arg0: i32) -> (i32, i32) {
    %c0_i32 = arith.constant 0 : i32
    %c0_i32_0 = arith.constant 0 : i32
    %c0_i32_1 = arith.constant 0 : i32
    return %c0_i32, %c0_i32_0 : i32, i32
  }
  func.func @transform_4(%arg0: i32) -> (i32, i32) {
    %c0_i32 = arith.constant 0 : i32
    %c0_i32_0 = arith.constant 0 : i32
    %c0_i32_1 = arith.constant 0 : i32
    return %c0_i32, %c0_i32_0 : i32, i32
  }
  func.func @transform_5(%arg0: i32) -> (i32, i32) {
    %c0_i32 = arith.constant 0 : i32
    %c0_i32_0 = arith.constant 0 : i32
    %c0_i32_1 = arith.constant 0 : i32
    return %c0_i32, %c0_i32_0 : i32, i32
  }
  func.func @transform_6(%arg0: i32) -> (i32, i32) {
    %c0_i32 = arith.constant 0 : i32
    %c0_i32_0 = arith.constant 0 : i32
    %c0_i32_1 = arith.constant 0 : i32
    return %c0_i32, %c0_i32_0 : i32, i32
  }
  func.func @transform_7(%arg0: i32) -> (i32, i32) {
    %c0_i32 = arith.constant 0 : i32
    %c0_i32_0 = arith.constant 0 : i32
    return %arg0, %c0_i32 : i32, i32
  }
}

</mosaic_0001>

<llo_original>
// kernel: tpu_custom_call.1
$region0: #{tpu_custom_call.1}
  #allocation0 [shape = 'u32[]', space=smem, size = 0x4, offset = 0x4, fixed_abs, tag = 'smem constant byte address 0x4 - core index']
  #allocation1 [shape = 'u32[72,128]{1,0:T(1,128)}', space=vmem, size = 0x9000, scoped, tag = 'internal scratch']
  #allocation2 [shape = 'f32[1,1]{1,0:T(1,128)S(1)}', space=vmem, size = 0x200, scoped, tag = 'scoped memory for tpu_custom_call.1']
  %s0 = inlined_call_operand.hbm [shape: f32[8,64], index: 0, kind: input, shape index: {}]
  %s1 = inlined_call_operand.hbm [shape: bf16[64,256], index: 1, kind: input, shape index: {}]
  %s2 = inlined_call_operand.vmem [shape: f32[1,256], index: 2, kind: input, shape index: {}]
  %s3 = inlined_call_operand.hbm [shape: bf16[256,128], index: 3, kind: input, shape index: {}]
  %s4 = inlined_call_operand.vmem [shape: f32[1,128], index: 4, kind: input, shape index: {}]
  %s5 = inlined_call_operand.vmem [shape: f32[1,128], index: 5, kind: input, shape index: {}]
  %s6 = inlined_call_operand.<no memory space> [shape: f32[1,1], index: 6, kind: input, shape index: {}]
  %s7 = inlined_call_operand.vmem [shape: f32[8,1], index: 7, kind: output, shape index: {}]
  %s8 = sld [smem:[#allocation0]]
  $region50: #{tpu_custom_call.1} parent=0
    _
  %s10 = ssub.s32 1, %s8
  %s11 = scalar_select 0, %s10, %s8
  %v12 = vstv %s6
  %13 = vst [vmem:[#allocation2] sm:$0x1] %v12
  $region1: #{tpu_custom_call.1} parent=0
    #allocation3 [shape = 'u8[4096]{0}', space=vmem, size = 0x1000, scoped, tag = 'input window, operand 0, single buffered']
    #allocation4 [shape = 's32[1]{0}', space=sflag, size = 0x4, scoped, tag = 'scoped memory for tpu_custom_call.1']
    #allocation5 [shape = 'u8[32768]{0}', space=vmem, size = 0x8000, scoped, tag = 'input window, operand 1, single buffered']
    #allocation6 [shape = 's32[1]{0}', space=sflag, size = 0x4, scoped, tag = 'scoped memory for tpu_custom_call.1']
    #allocation7 [shape = 'u8[65536]{0}', space=vmem, size = 0x10000, scoped, tag = 'input window, operand 3, single buffered']
    %14 = vsyncpa [#allocation4], 0
    %15 = vsyncpa [#allocation6], 0
    // Predicated region
    $region2: #{tpu_custom_call.1} parent=1 // pred_check
      _
    $region3: #{tpu_custom_call.1} parent=1 // pred_check_branch
      %17 = sbr.rel (0) target = $region5
    $region4: #{tpu_custom_call.1} parent=1 // pred_region
      %19 = vsyncadd [#allocation4], 0
      %s21 = sshll.u32 %s0, 4
      %s22 = int_to_ptr.hbm [resolvable:$true] %s21
      %s23 = sshll.u32 [#allocation3], 4
      %s24 = int_to_ptr.vmem [resolvable:$true] %s23
      %26 = dma.hbm_to_vmem [thread:$0]  %s22, 128, %s24, [#allocation4]
    $region5: #{tpu_custom_call.1} parent=1 // pred_fallthru
      _
    // Predicated region
    $region6: #{tpu_custom_call.1} parent=1 // pred_check
      _
    $region7: #{tpu_custom_call.1} parent=1 // pred_check_branch
      %28 = sbr.rel (0) target = $region9
    $region8: #{tpu_custom_call.1} parent=1 // pred_region
      %30 = vsyncadd [#allocation6], 0
      %s31 = sshll.u32 %s1, 4
      %s32 = int_to_ptr.hbm [resolvable:$true] %s31
      %s33 = sshll.u32 [#allocation5], 4
      %s34 = int_to_ptr.vmem [resolvable:$true] %s33
      %39 = dma.hbm_to_vmem [thread:$0]  %s32, 1024, %s34, [#allocation6], 128, 128, 8
    $region9: #{tpu_custom_call.1} parent=1 // pred_fallthru
      _
    // Predicated region
    $region10: #{tpu_custom_call.1} parent=1 // pred_check
      _
    $region11: #{tpu_custom_call.1} parent=1 // pred_check_branch
      %41 = sbr.rel (0) target = $region13
    $region12: #{tpu_custom_call.1} parent=1 // pred_region
      _
    $region13: #{tpu_custom_call.1} parent=1 // pred_fallthru
      _
    // Predicated region
    $region14: #{tpu_custom_call.1} parent=1 // pred_check
      _
    $region15: #{tpu_custom_call.1} parent=1 // pred_check_branch
      %43 = sbr.rel (0) target = $region17
    $region16: #{tpu_custom_call.1} parent=1 // pred_region
      %45 = vsyncadd [#allocation6], 0
      %s46 = sshll.u32 %s3, 4
      %s47 = int_to_ptr.hbm [resolvable:$true] %s46
      %s48 = sshll.u32 [#allocation7], 4
      %s49 = int_to_ptr.vmem [resolvable:$true] %s48
      %54 = dma.hbm_to_vmem [thread:$0]  %s47, 2048, %s49, [#allocation6], 64, 64, 4
    $region17: #{tpu_custom_call.1} parent=1 // pred_fallthru
      _
    // Predicated region
    $region18: #{tpu_custom_call.1} parent=1 // pred_check
      _
    $region19: #{tpu_custom_call.1} parent=1 // pred_check_branch
      %56 = sbr.rel (0) target = $region21
    $region20: #{tpu_custom_call.1} parent=1 // pred_region
      _
    $region21: #{tpu_custom_call.1} parent=1 // pred_fallthru
      _
    // Predicated region
    $region22: #{tpu_custom_call.1} parent=1 // pred_check
      _
    $region23: #{tpu_custom_call.1} parent=1 // pred_check_branch
      %58 = sbr.rel (0) target = $region25
    $region24: #{tpu_custom_call.1} parent=1 // pred_region
      _
    $region25: #{tpu_custom_call.1} parent=1 // pred_fallthru
      _
    // Predicated region
    $region26: #{tpu_custom_call.1} parent=1 // pred_check
      _
    $region27: #{tpu_custom_call.1} parent=1 // pred_check_branch
      %60 = sbr.rel (0) target = $region29
    $region28: #{tpu_custom_call.1} parent=1 // pred_region
      _
    $region29: #{tpu_custom_call.1} parent=1 // pred_fallthru
      _
    // Predicated region
    $region30: #{tpu_custom_call.1} parent=1 // pred_check
      _
    $region31: #{tpu_custom_call.1} parent=1 // pred_check_branch
      %62 = sbr.rel (0) target = $region33
    $region32: #{tpu_custom_call.1} parent=1 // pred_region
      %64 = dma.done [#allocation4], 128
    $region33: #{tpu_custom_call.1} parent=1 // pred_fallthru
      _
    // Predicated region
    $region34: #{tpu_custom_call.1} parent=1 // pred_check
      _
    $region35: #{tpu_custom_call.1} parent=1 // pred_check_branch
      %66 = sbr.rel (0) target = $region37
    $region36: #{tpu_custom_call.1} parent=1 // pred_region
      %68 = dma.done [#allocation6], 1024
    $region37: #{tpu_custom_call.1} parent=1 // pred_fallthru
      _
    // Predicated region
    $region38: #{tpu_custom_call.1} parent=1 // pred_check
      _
    $region39: #{tpu_custom_call.1} parent=1 // pred_check_branch
      %70 = sbr.rel (0) target = $region41
    $region40: #{tpu_custom_call.1} parent=1 // pred_region
      %72 = dma.done [#allocation6], 2048
    $region41: #{tpu_custom_call.1} parent=1 // pred_fallthru
      _
    %v74 = vld [vmem:[#allocation3] sm:$0xff]
    %v75 = vpack.c.bf16 %v74, %v74
    %v76 = vld [vmem:[#allocation5] sm:$0xff]
    %v77 = vld [vmem:[#allocation5 + $0x8] sm:$0xff]
    %v78 = vld [vmem:[#allocation5 + $0x10] sm:$0xff]
    %v79 = vld [vmem:[#allocation5 + $0x18] sm:$0xff]
    %v80 = vld [vmem:[#allocation5 + $0x20] sm:$0xff]
    %v81 = vld [vmem:[#allocation5 + $0x28] sm:$0xff]
    %v82 = vld [vmem:[#allocation5 + $0x30] sm:$0xff]
    %v83 = vld [vmem:[#allocation5 + $0x38] sm:$0xff]
    %v84 = vld [vmem:[%s2] sm:$0x3]
    %v86 = vperm.slane %v84, 0
    %v87 = vperm.slane %v84, 1
    %v98 = vunpack.c.l.b16 %v76
    %v99 = vunpack.c.h.b16 %v76
    %v100 = vunpack.c.l.b16 %v77
    %v101 = vunpack.c.h.b16 %v77
    %v102 = vunpack.c.l.b16 %v78
    %v103 = vunpack.c.h.b16 %v78
    %v104 = vunpack.c.l.b16 %v79
    %v105 = vunpack.c.h.b16 %v79
    %v106 = vunpack.c.l.b16 %v80
    %v107 = vunpack.c.h.b16 %v80
    %v108 = vunpack.c.l.b16 %v81
    %v109 = vunpack.c.h.b16 %v81
    %v110 = vunpack.c.l.b16 %v82
    %v111 = vunpack.c.h.b16 %v82
    %v112 = vunpack.c.l.b16 %v83
    %v113 = vunpack.c.h.b16 %v83
    %v114 = vpack.c.b16 %v100, %v98
    %v115 = vpack.c.b16 %v101, %v99
    %v116 = vpack.c.b16 %v104, %v102
    %v117 = vpack.c.b16 %v105, %v103
    %v118 = vpack.c.b16 %v108, %v106
    %v119 = vpack.c.b16 %v109, %v107
    %v120 = vpack.c.b16 %v112, %v110
    %v121 = vpack.c.b16 %v113, %v111
    %vm130 = vcmask 523264
    %v132 = vsel %vm130, %v75, 0
    %134 = vmatpush.bf16.msra.mxu0 0
    %135 = vmatpush.bf16.msra.mxu0 0
    %136 = vmatpush.bf16.msra.mxu0 0
    %137 = vmatpush.bf16.msra.mxu0 0
    %138 = vmatpush.bf16.msra.mxu0 %v120
    %139 = vmatpush.bf16.msra.mxu0 %v118
    %140 = vmatpush.bf16.msra.mxu0 %v116
    %141 = vmatpush.bf16.msra.mxu0 %v114
    %142 = vmatmul.bf16.gmra.mxu0 %v132
    %v143 = vpop.f32.mrf.mxu0
    %v144 = vadd.f32 %v86, %v143
    %v145 = vpop.f32.mrf.mxu0
    %146 = vdwg.mxu0
    %147 = vmatpush.bf16.msra.mxu0 0
    %148 = vmatpush.bf16.msra.mxu0 0
    %149 = vmatpush.bf16.msra.mxu0 0
    %150 = vmatpush.bf16.msra.mxu0 0
    %151 = vmatpush.bf16.msra.mxu0 %v121
    %152 = vmatpush.bf16.msra.mxu0 %v119
    %153 = vmatpush.bf16.msra.mxu0 %v117
    %154 = vmatpush.bf16.msra.mxu0 %v115
    %155 = vmatmul.bf16.gmra.mxu0 %v132
    %v156 = vpop.f32.mrf.mxu0
    %v157 = vadd.f32 %v87, %v156
    %v158 = vpop.f32.mrf.mxu0
    %159 = vdwg.mxu0
    %v160 = vmul.f32 %v144, 0.2
    %v161 = vmul.f32 %v157, 0.2
    %v162 = vmax.f32 %v144, %v160
    %v163 = vmax.f32 %v157, %v161
    %v164 = vpack.c.bf16 %v162, %v162
    %v165 = vpack.c.bf16 %v163, %v163
    %v166 = vld [vmem:[#allocation7] sm:$0xf]
    %v167 = vld [vmem:[#allocation7 + $0x4] sm:$0xf]
    %v168 = vld [vmem:[#allocation7 + $0x8] sm:$0xf]
    %v169 = vld [vmem:[#allocation7 + $0xc] sm:$0xf]
    %v170 = vld [vmem:[#allocation7 + $0x10] sm:$0xf]
    %v171 = vld [vmem:[#allocation7 + $0x14] sm:$0xf]
    %v172 = vld [vmem:[#allocation7 + $0x18] sm:$0xf]
    %v173 = vld [vmem:[#allocation7 + $0x1c] sm:$0xf]
    %v174 = vld [vmem:[#allocation7 + $0x20] sm:$0xf]
    %v175 = vld [vmem:[#allocation7 + $0x24] sm:$0xf]
    %v176 = vld [vmem:[#allocation7 + $0x28] sm:$0xf]
    %v177 = vld [vmem:[#allocation7 + $0x2c] sm:$0xf]
    %v178 = vld [vmem:[#allocation7 + $0x30] sm:$0xf]
    %v179 = vld [vmem:[#allocation7 + $0x34] sm:$0xf]
    %v180 = vld [vmem:[#allocation7 + $0x38] sm:$0xf]
    %v181 = vld [vmem:[#allocation7 + $0x3c] sm:$0xf]
    %v182 = vld [vmem:[#allocation7 + $0x40] sm:$0xf]
    %v183 = vld [vmem:[#allocation7 + $0x44] sm:$0xf]
    %v184 = vld [vmem:[#allocation7 + $0x48] sm:$0xf]
    %v185 = vld [vmem:[#allocation7 + $0x4c] sm:$0xf]
    %v186 = vld [vmem:[#allocation7 + $0x50] sm:$0xf]
    %v187 = vld [vmem:[#allocation7 + $0x54] sm:$0xf]
    %v188 = vld [vmem:[#allocation7 + $0x58] sm:$0xf]
    %v189 = vld [vmem:[#allocation7 + $0x5c] sm:$0xf]
    %v190 = vld [vmem:[#allocation7 + $0x60] sm:$0xf]
    %v191 = vld [vmem:[#allocation7 + $0x64] sm:$0xf]
    %v192 = vld [vmem:[#allocation7 + $0x68] sm:$0xf]
    %v193 = vld [vmem:[#allocation7 + $0x6c] sm:$0xf]
    %v194 = vld [vmem:[#allocation7 + $0x70] sm:$0xf]
    %v195 = vld [vmem:[#allocation7 + $0x74] sm:$0xf]
    %v196 = vld [vmem:[#allocation7 + $0x78] sm:$0xf]
    %v197 = vld [vmem:[#allocation7 + $0x7c] sm:$0xf]
    %v198 = vld [vmem:[%s4] sm:$0x1]
    %v200 = vperm.slane %v198, 0
    %v234 = vunpack.c.l.b16 %v166
    %v235 = vunpack.c.l.b16 %v167
    %v236 = vunpack.c.l.b16 %v168
    %v237 = vunpack.c.l.b16 %v169
    %v238 = vunpack.c.l.b16 %v170
    %v239 = vunpack.c.l.b16 %v171
    %v240 = vunpack.c.l.b16 %v172
    %v241 = vunpack.c.l.b16 %v173
    %v242 = vunpack.c.l.b16 %v174
    %v243 = vunpack.c.l.b16 %v175
    %v244 = vunpack.c.l.b16 %v176
    %v245 = vunpack.c.l.b16 %v177
    %v246 = vunpack.c.l.b16 %v178
    %v247 = vunpack.c.l.b16 %v179
    %v248 = vunpack.c.l.b16 %v180
    %v249 = vunpack.c.l.b16 %v181
    %v250 = vunpack.c.l.b16 %v182
    %v251 = vunpack.c.l.b16 %v183
    %v252 = vunpack.c.l.b16 %v184
    %v253 = vunpack.c.l.b16 %v185
    %v254 = vunpack.c.l.b16 %v186
    %v255 = vunpack.c.l.b16 %v187
    %v256 = vunpack.c.l.b16 %v188
    %v257 = vunpack.c.l.b16 %v189
    %v258 = vunpack.c.l.b16 %v190
    %v259 = vunpack.c.l.b16 %v191
    %v260 = vunpack.c.l.b16 %v192
    %v261 = vunpack.c.l.b16 %v193
    %v262 = vunpack.c.l.b16 %v194
    %v263 = vunpack.c.l.b16 %v195
    %v264 = vunpack.c.l.b16 %v196
    %v265 = vunpack.c.l.b16 %v197
    %v266 = vpack.c.b16 %v235, %v234
    %v267 = vpack.c.b16 %v237, %v236
    %v268 = vpack.c.b16 %v239, %v238
    %v269 = vpack.c.b16 %v241, %v240
    %v270 = vpack.c.b16 %v243, %v242
    %v271 = vpack.c.b16 %v245, %v244
    %v272 = vpack.c.b16 %v247, %v246
    %v273 = vpack.c.b16 %v249, %v248
    %v274 = vpack.c.b16 %v251, %v250
    %v275 = vpack.c.b16 %v253, %v252
    %v276 = vpack.c.b16 %v255, %v254
    %v277 = vpack.c.b16 %v257, %v256
    %v278 = vpack.c.b16 %v259, %v258
    %v279 = vpack.c.b16 %v261, %v260
    %v280 = vpack.c.b16 %v263, %v262
    %v281 = vpack.c.b16 %v265, %v264
    %298 = vmatpush.bf16.msra.mxu0 %v273
    %299 = vmatpush.bf16.msra.mxu0 %v272
    %300 = vmatpush.bf16.msra.mxu0 %v271
    %301 = vmatpush.bf16.msra.mxu0 %v270
    %302 = vmatpush.bf16.msra.mxu0 %v269
    %303 = vmatpush.bf16.msra.mxu0 %v268
    %304 = vmatpush.bf16.msra.mxu0 %v267
    %305 = vmatpush.bf16.msra.mxu0 %v266
    %306 = vmatmul.bf16.gmra.mxu0 %v164
    %v307 = vpop.f32.mrf.mxu0
    %v308 = vadd.f32 %v200, %v307
    %v309 = vpop.f32.mrf.mxu0
    %310 = vdwg.mxu0
    %311 = vmatpush.bf16.msra.mxu0 %v281
    %312 = vmatpush.bf16.msra.mxu0 %v280
    %313 = vmatpush.bf16.msra.mxu0 %v279
    %314 = vmatpush.bf16.msra.mxu0 %v278
    %315 = vmatpush.bf16.msra.mxu0 %v277
    %316 = vmatpush.bf16.msra.mxu0 %v276
    %317 = vmatpush.bf16.msra.mxu0 %v275
    %318 = vmatpush.bf16.msra.mxu0 %v274
    %319 = vmatmul.bf16.gmra.mxu0 %v165
    %v320 = vpop.f32.mrf.mxu0
    %v321 = vadd.f32 %v308, %v320
    %v322 = vpop.f32.mrf.mxu0
    %323 = vdwg.mxu0
    %v324 = vmul.f32 %v321, 0.2
    %v325 = vmax.f32 %v321, %v324
    %v326 = vld [vmem:[%s5] sm:$0x1]
    %v328 = vperm.slane %v326, 0
    %v330 = vmul.f32 %v325, %v328
    %331 = vadd.xlane.f32.xlu0 %v330
    %v332 = vpop.xlane.xlu0 %331
    %v333 = vld [vmem:[#allocation2] sm:$0x1]
    %v335 = vperm.slane %v333, 0
    %v337 = vadd.f32 %v332, %v335
    %v338 = vsub.f32 0.0, %v337
    %v339 = vmul.f32 %v338, 1.442695
    %v340 = vpow.pop %v339
    %v341 = vadd.f32 %v340, 1.0
    %v342 = vrcp.pop %v341
    %vm343 = vcmask 7168
    %344 = vst.msk [vmem:[%s7] sm:$0xff] %vm343, %v342
    // Predicated region
    $region42: #{tpu_custom_call.1} parent=1 // pred_check
      _
    $region43: #{tpu_custom_call.1} parent=1 // pred_check_branch
      %346 = sbr.rel (0) target = $region45
    $region44: #{tpu_custom_call.1} parent=1 // pred_region
      _
    $region45: #{tpu_custom_call.1} parent=1 // pred_fallthru
      _
    // Predicated region
    $region46: #{tpu_custom_call.1} parent=1 // pred_check
      _
    $region47: #{tpu_custom_call.1} parent=1 // pred_check_branch
      %348 = sbr.rel (0) target = $region49
    $region48: #{tpu_custom_call.1} parent=1 // pred_region
      _
    $region49: #{tpu_custom_call.1} parent=1 // pred_fallthru
      _
    %349 = vsyncpa [#allocation4], 1
    %350 = vsyncpa [#allocation6], 1

</llo_original>
